<compile_context>
chip_gen: v7x
topology: tpu7x:2x2x1
jax: 0.10.0
libtpu: 0.0.40
codegen_flags: <defaults>
</compile_context>

<pallas_src>
import functools
import math

import jax
import jax.numpy as jnp
from jax.experimental import pallas as pl
from jax.experimental.pallas import tpu as pltpu


# ----------------------------------------------------------------------------
# Kernel
# ----------------------------------------------------------------------------
def _prenet_kernel(*refs, n_layers):
    """refs = (x_ref, w1, b1, w2, b2, ..., o_ref).

    Computes   h = relu(x @ W_l + b_l)   for each layer l (dropout = identity,
    eval mode), entirely in VMEM for one (TM, in_dim) row tile.  Weights are
    already stored in their MXU dtype (bf16 by default); accumulation and all
    elementwise work stay in f32.
    """
    x_ref = refs[0]
    o_ref = refs[-1]
    wb_refs = refs[1:-1]

    h = x_ref[...]
    for layer in range(n_layers):
        w = wb_refs[2 * layer][...]          # resident, pre-cast in wrapper
        b = wb_refs[2 * layer + 1][...]      # f32
        y = jnp.dot(h.astype(w.dtype), w,
                    preferred_element_type=jnp.float32) + b
        h = jnp.maximum(y, 0.0)              # f32 elementwise (v5e-friendly)
        # TODO(synk): nn.Dropout(0.5) train-mode randomness not reproduced.
    o_ref[...] = h.astype(o_ref.dtype)


# ----------------------------------------------------------------------------
# Wrapper
# ----------------------------------------------------------------------------
def _round_up(x, m):
    return (x + m - 1) // m * m


def prenet_forward(x, params, *, tile_m=2048, bf16_matmul=True,
                   out_dtype=None):
    """x: (..., in_dim) -> (..., sizes[-1]).

    params: list of (w, b) per layer, w stored as (fan_in, fan_out).
    bf16_matmul: feed bf16 operands to the MXU (f32 accumulation).
    out_dtype: output dtype (defaults to x.dtype); bf16 halves output HBM
               traffic if the surrounding model tolerates it.
    """
    *lead, in_dim = x.shape
    M = int(math.prod(lead)) if lead else 1
    out_dim = params[-1][0].shape[1]
    n_layers = len(params)
    out_dtype = jnp.dtype(out_dtype or x.dtype)
    w_dtype = jnp.bfloat16 if bf16_matmul else jnp.float32

    x2 = x.reshape(M, in_dim)

    # Row-tile: multiple of 8 sublanes, capped at tile_m.  For large M force at
    # least 2 grid tiles so the "parallel" axis can feed both v7x TensorCores.
    tm = min(tile_m, _round_up(M, 8))
    if M >= 1024:
        tm = min(tm, _round_up(pl.cdiv(M, 2), 8))
    grid = (pl.cdiv(M, tm),)   # ragged last block is masked by Pallas

    # BlockSpecs: activations tiled over M, weights/biases resident (constant
    # index_map -> fetched once for the whole grid).
    in_specs = [pl.BlockSpec((tm, in_dim), lambda i: (i, 0))]
    flat_args = [x2]
    for (w, b) in params:
        k, n = w.shape
        in_specs.append(pl.BlockSpec((k, n), lambda i: (0, 0)))
        in_specs.append(pl.BlockSpec((1, n), lambda i: (0, 0)))
        flat_args.append(w.astype(w_dtype))           # cast once, stays resident
        flat_args.append(b.reshape(1, n).astype(jnp.float32))

    # Advisory cost estimate so XLA can overlap this small call with neighbors.
    flops = 2 * M * sum(w.shape[0] * w.shape[1] for (w, _) in params)
    bytes_accessed = (
        M * in_dim * jnp.dtype(x2.dtype).itemsize
        + sum(w.size * jnp.dtype(w_dtype).itemsize + b.size * 4
              for (w, b) in params)
        + M * out_dim * out_dtype.itemsize)

    out = pl.pallas_call(
        functools.partial(_prenet_kernel, n_layers=n_layers),
        out_shape=jax.ShapeDtypeStruct((M, out_dim), out_dtype),
        grid=grid,
        in_specs=in_specs,
        out_specs=pl.BlockSpec((tm, out_dim), lambda i: (i, 0)),
        compiler_params=pltpu.CompilerParams(
            dimension_semantics=("parallel",)),
        cost_estimate=pl.CostEstimate(
            flops=flops, transcendentals=0, bytes_accessed=bytes_accessed),
    )(*flat_args)

    return out.reshape(*lead, out_dim)


# ----------------------------------------------------------------------------
# Parameter init (matches nn.Linear defaults: U(-1/sqrt(fan_in), 1/sqrt(fan_in)))
# ----------------------------------------------------------------------------
def init_prenet_params(key, in_dim, sizes=(256, 128)):
    params = []
    fan_ins = [in_dim] + list(sizes[:-1])
    for fan_in, fan_out in zip(fan_ins, sizes):
        key, kw, kb = jax.random.split(key, 3)
        bound = 1.0 / math.sqrt(fan_in)
        w = jax.random.uniform(kw, (fan_in, fan_out), jnp.float32, -bound, bound)
        b = jax.random.uniform(kb, (fan_out,), jnp.float32, -bound, bound)
        params.append((w, b))
    return params


# ----------------------------------------------------------------------------
def _prenet_reference(x, params):
    h = x
    for (w, b) in params:
        h = jnp.maximum(h @ w + b, 0.0)   # dropout = identity (eval)
    return h


if __name__ == "__main__":
    B, T, IN_DIM = 2, 8, 64
    SIZES = (256, 128)

    key = jax.random.PRNGKey(0)
    k_par, k_in = jax.random.split(key)

    params = init_prenet_params(k_par, IN_DIM, SIZES)
    inputs = jax.random.normal(k_in, (B, T, IN_DIM), jnp.float32)

    ref = _prenet_reference(inputs.reshape(B * T, IN_DIM), params).reshape(
        B, T, SIZES[-1])

    # Default (bf16 MXU operands, f32 accumulation) — relaxed tolerance.
    out = prenet_forward(inputs, params)
    out = jax.block_until_ready(out)
    assert out.shape == (B, T, SIZES[-1]), out.shape
    assert bool(jnp.all(jnp.isfinite(out)))
    assert bool(jnp.allclose(out.astype(jnp.float32), ref, atol=3e-2, rtol=3e-2)), (
        float(jnp.max(jnp.abs(out.astype(jnp.float32) - ref))))

    # Exact f32 path — tight tolerance against the reference.
    out_f32 = prenet_forward(inputs, params, bf16_matmul=False)
    out_f32 = jax.block_until_ready(out_f32)
    assert bool(jnp.allclose(out_f32, ref, atol=1e-5, rtol=1e-5)), (
        float(jnp.max(jnp.abs(out_f32 - ref))))

    print("KERNEL_OK")
</pallas_src>

<mosaic_0001>
module attributes {stable_mosaic.version = 11 : i64} {
  func.func @_prenet_kernel(%arg0: i32, %arg1: memref<16x64xf32, #tpu.memory_space<vmem>>, %arg2: memref<64x256xbf16, #tpu.memory_space<vmem>>, %arg3: memref<1x256xf32, #tpu.memory_space<vmem>>, %arg4: memref<256x128xbf16, #tpu.memory_space<vmem>>, %arg5: memref<1x128xf32, #tpu.memory_space<vmem>>, %arg6: memref<16x128xf32, #tpu.memory_space<vmem>>) attributes {dimension_semantics = [#tpu.dimension_semantics<parallel>], iteration_bounds = array<i64: 1>, scalar_prefetch = 0 : i64, scratch_operands = 0 : i64, tpu.core_type = #tpu.core_type<tc>, window_params = [{transform_indices = @transform_0, window_bounds = array<i64: 16, 64>}, {pipeline_mode = #tpu.pipeline_mode<synchronous>, transform_indices = @transform_1, window_bounds = array<i64: 64, 256>}, {pipeline_mode = #tpu.pipeline_mode<synchronous>, transform_indices = @transform_2, window_bounds = array<i64: 1, 256>}, {pipeline_mode = #tpu.pipeline_mode<synchronous>, transform_indices = @transform_3, window_bounds = array<i64: 256, 128>}, {pipeline_mode = #tpu.pipeline_mode<synchronous>, transform_indices = @transform_4, window_bounds = array<i64: 1, 128>}, {transform_indices = @transform_5, window_bounds = array<i64: 16, 128>}]} {
    %c0 = arith.constant 0 : index
    %c0_0 = arith.constant 0 : index
    %0 = vector.load %arg1[%c0, %c0_0] : memref<16x64xf32, #tpu.memory_space<vmem>>, vector<16x64xf32>
    %c0_1 = arith.constant 0 : index
    %c0_2 = arith.constant 0 : index
    %1 = vector.load %arg2[%c0_1, %c0_2] : memref<64x256xbf16, #tpu.memory_space<vmem>>, vector<64x256xbf16>
    %c0_3 = arith.constant 0 : index
    %c0_4 = arith.constant 0 : index
    %2 = vector.load %arg3[%c0_3, %c0_4] : memref<1x256xf32, #tpu.memory_space<vmem>>, vector<1x256xf32>
    %3 = arith.truncf %0 : vector<16x64xf32> to vector<16x64xbf16>
    %cst = arith.constant dense<0.000000e+00> : vector<16x256xf32>
    %4 = tpu.matmul %3, %1, %cst {dimension_numbers = #tpu.dot_dimension_numbers<[1], [0], [0], [1], [0, 0, 1, 1], [], []>} : vector<16x64xbf16>, vector<64x256xbf16>, vector<16x256xf32> -> vector<16x256xf32>
    %5 = vector.broadcast %2 : vector<1x256xf32> to vector<16x256xf32>
    %6 = arith.addf %4, %5 : vector<16x256xf32>
    %cst_5 = arith.constant 0.000000e+00 : f32
    %7 = vector.broadcast %cst_5 : f32 to vector<16x256xf32>
    %8 = arith.maximumf %6, %7 : vector<16x256xf32>
    %c0_6 = arith.constant 0 : index
    %c0_7 = arith.constant 0 : index
    %9 = vector.load %arg4[%c0_6, %c0_7] : memref<256x128xbf16, #tpu.memory_space<vmem>>, vector<256x128xbf16>
    %c0_8 = arith.constant 0 : index
    %c0_9 = arith.constant 0 : index
    %10 = vector.load %arg5[%c0_8, %c0_9] : memref<1x128xf32, #tpu.memory_space<vmem>>, vector<1x128xf32>
    %11 = arith.truncf %8 : vector<16x256xf32> to vector<16x256xbf16>
    %cst_10 = arith.constant dense<0.000000e+00> : vector<16x128xf32>
    %12 = tpu.matmul %11, %9, %cst_10 {dimension_numbers = #tpu.dot_dimension_numbers<[1], [0], [0], [1], [0, 0, 1, 1], [], []>} : vector<16x256xbf16>, vector<256x128xbf16>, vector<16x128xf32> -> vector<16x128xf32>
    %13 = vector.broadcast %10 : vector<1x128xf32> to vector<16x128xf32>
    %14 = arith.addf %12, %13 : vector<16x128xf32>
    %cst_11 = arith.constant 0.000000e+00 : f32
    %15 = vector.broadcast %cst_11 : f32 to vector<16x128xf32>
    %16 = arith.maximumf %14, %15 : vector<16x128xf32>
    %c0_12 = arith.constant 0 : index
    %c0_13 = arith.constant 0 : index
    %17 = vector.load %arg6[%c0_12, %c0_13] : memref<16x128xf32, #tpu.memory_space<vmem>>, vector<16x128xf32>
    tpu.vector_store %arg6[%c0_12, %c0_13], %16 {strides = array<i32>} : memref<16x128xf32, #tpu.memory_space<vmem>>, vector<16x128xf32>,
    return
  }
  func.func @transform_0(%arg0: i32) -> (i32, i32) {
    %c0_i32 = arith.constant 0 : i32
    %c0_i32_0 = arith.constant 0 : i32
    return %arg0, %c0_i32 : i32, i32
  }
  func.func @transform_1(%arg0: i32) -> (i32, i32) {
    %c0_i32 = arith.constant 0 : i32
    %c0_i32_0 = arith.constant 0 : i32
    %c0_i32_1 = arith.constant 0 : i32
    return %c0_i32, %c0_i32_0 : i32, i32
  }
  func.func @transform_2(%arg0: i32) -> (i32, i32) {
    %c0_i32 = arith.constant 0 : i32
    %c0_i32_0 = arith.constant 0 : i32
    %c0_i32_1 = arith.constant 0 : i32
    return %c0_i32, %c0_i32_0 : i32, i32
  }
  func.func @transform_3(%arg0: i32) -> (i32, i32) {
    %c0_i32 = arith.constant 0 : i32
    %c0_i32_0 = arith.constant 0 : i32
    %c0_i32_1 = arith.constant 0 : i32
    return %c0_i32, %c0_i32_0 : i32, i32
  }
  func.func @transform_4(%arg0: i32) -> (i32, i32) {
    %c0_i32 = arith.constant 0 : i32
    %c0_i32_0 = arith.constant 0 : i32
    %c0_i32_1 = arith.constant 0 : i32
    return %c0_i32, %c0_i32_0 : i32, i32
  }
  func.func @transform_5(%arg0: i32) -> (i32, i32) {
    %c0_i32 = arith.constant 0 : i32
    %c0_i32_0 = arith.constant 0 : i32
    return %arg0, %c0_i32 : i32, i32
  }
}

</mosaic_0001>

<llo_original>
// kernel: tpu_custom_call.1
$region0: #{tpu_custom_call.1}
  #allocation0 [shape = 'u32[]', space=smem, size = 0x4, offset = 0x4, fixed_abs, tag = 'smem constant byte address 0x4 - core index']
  #allocation1 [shape = 'u32[144,128]{1,0:T(1,128)}', space=vmem, size = 0x12000, scoped, tag = 'internal scratch']
  %s0 = inlined_call_operand.hbm [shape: f32[16,64], index: 0, kind: input, shape index: {}]
  %s1 = inlined_call_operand.hbm [shape: bf16[64,256], index: 1, kind: input, shape index: {}]
  %s2 = inlined_call_operand.vmem [shape: f32[1,256], index: 2, kind: input, shape index: {}]
  %s3 = inlined_call_operand.hbm [shape: bf16[256,128], index: 3, kind: input, shape index: {}]
  %s4 = inlined_call_operand.vmem [shape: f32[1,128], index: 4, kind: input, shape index: {}]
  %s5 = inlined_call_operand.hbm [shape: f32[16,128], index: 5, kind: output, shape index: {}]
  %s6 = sld [smem:[#allocation0]]
  $region42: #{tpu_custom_call.1} parent=0
    _
  %s8 = ssub.s32 1, %s6
  %s9 = scalar_select 0, %s8, %s6
  $region1: #{tpu_custom_call.1} parent=0
    #allocation2 [shape = 'u8[8192]{0}', space=vmem, size = 0x2000, scoped, tag = 'input window, operand 0, single buffered']
    #allocation3 [shape = 's32[1]{0}', space=sflag, size = 0x4, scoped, tag = 'scoped memory for tpu_custom_call.1']
    #allocation4 [shape = 's32[1]{0}', space=sflag, size = 0x4, scoped, tag = 'scoped memory for tpu_custom_call.1']
    #allocation5 [shape = 'u8[32768]{0}', space=vmem, size = 0x8000, scoped, tag = 'input window, operand 1, single buffered']
    #allocation6 [shape = 's32[1]{0}', space=sflag, size = 0x4, scoped, tag = 'scoped memory for tpu_custom_call.1']
    #allocation7 [shape = 'u8[65536]{0}', space=vmem, size = 0x10000, scoped, tag = 'input window, operand 3, single buffered']
    #allocation8 [shape = 'u8[8192]{0}', space=vmem, size = 0x2000, scoped, tag = 'output window, operand 0, single buffered']
    %10 = vsyncpa [#allocation3], 0
    %11 = vsyncpa [#allocation6], 0
    %12 = vsyncpa [#allocation4], 0
    // Predicated region
    $region2: #{tpu_custom_call.1} parent=1 // pred_check
      _
    $region3: #{tpu_custom_call.1} parent=1 // pred_check_branch
      %14 = sbr.rel (0) target = $region5
    $region4: #{tpu_custom_call.1} parent=1 // pred_region
      %s16 = ssub.s32 256, 256
      %17 = vsyncadd [#allocation3], %s16
      %s18 = sshll.u32 [#allocation2], 4
      %s19 = int_to_ptr.vmem [resolvable:$true] %s18
      %24 = dma.hbm_to_vmem [thread:$0]  %s0, 256, %s19, [#allocation3], 128, 128, 8
    $region5: #{tpu_custom_call.1} parent=1 // pred_fallthru
      _
    // Predicated region
    $region6: #{tpu_custom_call.1} parent=1 // pred_check
      _
    $region7: #{tpu_custom_call.1} parent=1 // pred_check_branch
      %26 = sbr.rel (0) target = $region9
    $region8: #{tpu_custom_call.1} parent=1 // pred_region
      %s28 = ssub.s32 1024, 1024
      %29 = vsyncadd [#allocation6], %s28
      %s30 = sshll.u32 [#allocation5], 4
      %s31 = int_to_ptr.vmem [resolvable:$true] %s30
      %36 = dma.hbm_to_vmem [thread:$0]  %s1, 1024, %s31, [#allocation6], 128, 128, 8
    $region9: #{tpu_custom_call.1} parent=1 // pred_fallthru
      _
    // Predicated region
    $region10: #{tpu_custom_call.1} parent=1 // pred_check
      _
    $region11: #{tpu_custom_call.1} parent=1 // pred_check_branch
      %38 = sbr.rel (0) target = $region13
    $region12: #{tpu_custom_call.1} parent=1 // pred_region
      _
    $region13: #{tpu_custom_call.1} parent=1 // pred_fallthru
      _
    // Predicated region
    $region14: #{tpu_custom_call.1} parent=1 // pred_check
      _
    $region15: #{tpu_custom_call.1} parent=1 // pred_check_branch
      %40 = sbr.rel (0) target = $region17
    $region16: #{tpu_custom_call.1} parent=1 // pred_region
      %s42 = ssub.s32 2048, 2048
      %43 = vsyncadd [#allocation6], %s42
      %s44 = sshll.u32 [#allocation7], 4
      %s45 = int_to_ptr.vmem [resolvable:$true] %s44
      %50 = dma.hbm_to_vmem [thread:$0]  %s3, 2048, %s45, [#allocation6], 64, 64, 4
    $region17: #{tpu_custom_call.1} parent=1 // pred_fallthru
      _
    // Predicated region
    $region18: #{tpu_custom_call.1} parent=1 // pred_check
      _
    $region19: #{tpu_custom_call.1} parent=1 // pred_check_branch
      %52 = sbr.rel (0) target = $region21
    $region20: #{tpu_custom_call.1} parent=1 // pred_region
      _
    $region21: #{tpu_custom_call.1} parent=1 // pred_fallthru
      _
    // Predicated region
    $region22: #{tpu_custom_call.1} parent=1 // pred_check
      _
    $region23: #{tpu_custom_call.1} parent=1 // pred_check_branch
      %54 = sbr.rel (0) target = $region25
    $region24: #{tpu_custom_call.1} parent=1 // pred_region
      %55 = dma.done [#allocation3], 256
    $region25: #{tpu_custom_call.1} parent=1 // pred_fallthru
      _
    // Predicated region
    $region26: #{tpu_custom_call.1} parent=1 // pred_check
      _
    $region27: #{tpu_custom_call.1} parent=1 // pred_check_branch
      %57 = sbr.rel (0) target = $region29
    $region28: #{tpu_custom_call.1} parent=1 // pred_region
      %58 = dma.done [#allocation6], 1024
    $region29: #{tpu_custom_call.1} parent=1 // pred_fallthru
      _
    // Predicated region
    $region30: #{tpu_custom_call.1} parent=1 // pred_check
      _
    $region31: #{tpu_custom_call.1} parent=1 // pred_check_branch
      %60 = sbr.rel (0) target = $region33
    $region32: #{tpu_custom_call.1} parent=1 // pred_region
      %61 = dma.done [#allocation6], 2048
    $region33: #{tpu_custom_call.1} parent=1 // pred_fallthru
      _
    %v63 = vld [vmem:[#allocation2] sm:$0xff]
    %v64 = vld [vmem:[#allocation2 + $0x8] sm:$0xff]
    %v65 = vld [vmem:[#allocation5] sm:$0xff]
    %v66 = vld [vmem:[#allocation5 + $0x8] sm:$0xff]
    %v67 = vld [vmem:[#allocation5 + $0x10] sm:$0xff]
    %v68 = vld [vmem:[#allocation5 + $0x18] sm:$0xff]
    %v69 = vld [vmem:[#allocation5 + $0x20] sm:$0xff]
    %v70 = vld [vmem:[#allocation5 + $0x28] sm:$0xff]
    %v71 = vld [vmem:[#allocation5 + $0x30] sm:$0xff]
    %v72 = vld [vmem:[#allocation5 + $0x38] sm:$0xff]
    %v73 = vld [vmem:[%s2] sm:$0x3]
    %v74 = vpack.c.bf16 %v64, %v63
    %v76 = vlaneseq
    %v77 = vshrl.u32 %v76, 7
    %v78 = vsub.s32 0, %v77
    %v79 = vrot.slane %v73, %v78
    %v80 = vlaneseq
    %v81 = vshrl.u32 %v80, 7
    %v82 = vsub.s32 1, %v81
    %v83 = vrot.slane %v73, %v82
    %v94 = vunpack.c.l.b16 %v65
    %v95 = vunpack.c.h.b16 %v65
    %v96 = vunpack.c.l.b16 %v66
    %v97 = vunpack.c.h.b16 %v66
    %v98 = vunpack.c.l.b16 %v67
    %v99 = vunpack.c.h.b16 %v67
    %v100 = vunpack.c.l.b16 %v68
    %v101 = vunpack.c.h.b16 %v68
    %v102 = vunpack.c.l.b16 %v69
    %v103 = vunpack.c.h.b16 %v69
    %v104 = vunpack.c.l.b16 %v70
    %v105 = vunpack.c.h.b16 %v70
    %v106 = vunpack.c.l.b16 %v71
    %v107 = vunpack.c.h.b16 %v71
    %v108 = vunpack.c.l.b16 %v72
    %v109 = vunpack.c.h.b16 %v72
    %v110 = vpack.c.b16 %v96, %v94
    %v111 = vpack.c.b16 %v97, %v95
    %v112 = vpack.c.b16 %v100, %v98
    %v113 = vpack.c.b16 %v101, %v99
    %v114 = vpack.c.b16 %v104, %v102
    %v115 = vpack.c.b16 %v105, %v103
    %v116 = vpack.c.b16 %v108, %v106
    %v117 = vpack.c.b16 %v109, %v107
    %vm126 = vcmask 523264
    %v128 = vsel %vm126, %v74, 0
    %130 = vmatprep.subr.bf16.mxu0 %v111
    %131 = vmatpush1.bf16.msra.mxu0 %v110
    %132 = vmatprep.subr.bf16.mxu0 %v113
    %133 = vmatpush1.bf16.msra.mxu0 %v112
    %134 = vmatprep.subr.bf16.mxu0 %v115
    %135 = vmatpush1.bf16.msra.mxu0 %v114
    %136 = vmatprep.subr.bf16.mxu0 %v117
    %137 = vmatpush1.bf16.msra.mxu0 %v116
    %138 = vmatprep.subr.bf16.mxu0 0
    %139 = vmatpush1.bf16.msra.mxu0 0
    %140 = vmatprep.subr.bf16.mxu0 0
    %141 = vmatpush1.bf16.msra.mxu0 0
    %142 = vmatprep.subr.bf16.mxu0 0
    %143 = vmatpush1.bf16.msra.mxu0 0
    %144 = vmatprep.subr.bf16.mxu0 0
    %145 = vmatpush1.bf16.msra.mxu0 0
    %146 = vmatprep.subr.bf16.mxu0 0
    %147 = vmatpush1.bf16.msra.mxu0 0
    %148 = vmatprep.subr.bf16.mxu0 0
    %149 = vmatpush1.bf16.msra.mxu0 0
    %150 = vmatprep.subr.bf16.mxu0 0
    %151 = vmatpush1.bf16.msra.mxu0 0
    %152 = vmatprep.subr.bf16.mxu0 0
    %153 = vmatpush1.bf16.msra.mxu0 0
    %154 = vmatprep.subr.bf16.mxu0 0
    %155 = vmatpush1.bf16.msra.mxu0 0
    %156 = vmatprep.subr.bf16.mxu0 0
    %157 = vmatpush1.bf16.msra.mxu0 0
    %158 = vmatprep.subr.bf16.mxu0 0
    %159 = vmatpush1.bf16.msra.mxu0 0
    %160 = vmatprep.subr.bf16.mxu0 0
    %161 = vmatpush1.bf16.msra.mxu0 0
    %162 = vmatprep.mubr.bf16.mxu0 0
    %163 = vmatmul.mubr.bf16.gmra.mrb[0].mxu0 %v128
    %v164 = vpop.f32.mrb[0].mxu0
    %v165 = vadd.f32 %v79, %v164
    %v166 = vpop.f32.mrb[0].mxu0
    %v167 = vadd.f32 %v83, %v166
    %v168 = vpop.f32.mrb[0].mxu0
    %v169 = vadd.f32 %v79, %v168
    %v170 = vpop.f32.mrb[0].mxu0
    %v171 = vadd.f32 %v83, %v170
    %172 = vdwg.mxu0
    %v173 = vmax.f32 %v165, 0.0
    %v174 = vmax.f32 %v167, 0.0
    %v175 = vmax.f32 %v169, 0.0
    %v176 = vmax.f32 %v171, 0.0
    %v177 = vld [vmem:[#allocation7] sm:$0xf]
    %v178 = vld [vmem:[#allocation7 + $0x4] sm:$0xf]
    %v179 = vld [vmem:[#allocation7 + $0x8] sm:$0xf]
    %v180 = vld [vmem:[#allocation7 + $0xc] sm:$0xf]
    %v181 = vld [vmem:[#allocation7 + $0x10] sm:$0xf]
    %v182 = vld [vmem:[#allocation7 + $0x14] sm:$0xf]
    %v183 = vld [vmem:[#allocation7 + $0x18] sm:$0xf]
    %v184 = vld [vmem:[#allocation7 + $0x1c] sm:$0xf]
    %v185 = vld [vmem:[#allocation7 + $0x20] sm:$0xf]
    %v186 = vld [vmem:[#allocation7 + $0x24] sm:$0xf]
    %v187 = vld [vmem:[#allocation7 + $0x28] sm:$0xf]
    %v188 = vld [vmem:[#allocation7 + $0x2c] sm:$0xf]
    %v189 = vld [vmem:[#allocation7 + $0x30] sm:$0xf]
    %v190 = vld [vmem:[#allocation7 + $0x34] sm:$0xf]
    %v191 = vld [vmem:[#allocation7 + $0x38] sm:$0xf]
    %v192 = vld [vmem:[#allocation7 + $0x3c] sm:$0xf]
    %v193 = vld [vmem:[#allocation7 + $0x40] sm:$0xf]
    %v194 = vld [vmem:[#allocation7 + $0x44] sm:$0xf]
    %v195 = vld [vmem:[#allocation7 + $0x48] sm:$0xf]
    %v196 = vld [vmem:[#allocation7 + $0x4c] sm:$0xf]
    %v197 = vld [vmem:[#allocation7 + $0x50] sm:$0xf]
    %v198 = vld [vmem:[#allocation7 + $0x54] sm:$0xf]
    %v199 = vld [vmem:[#allocation7 + $0x58] sm:$0xf]
    %v200 = vld [vmem:[#allocation7 + $0x5c] sm:$0xf]
    %v201 = vld [vmem:[#allocation7 + $0x60] sm:$0xf]
    %v202 = vld [vmem:[#allocation7 + $0x64] sm:$0xf]
    %v203 = vld [vmem:[#allocation7 + $0x68] sm:$0xf]
    %v204 = vld [vmem:[#allocation7 + $0x6c] sm:$0xf]
    %v205 = vld [vmem:[#allocation7 + $0x70] sm:$0xf]
    %v206 = vld [vmem:[#allocation7 + $0x74] sm:$0xf]
    %v207 = vld [vmem:[#allocation7 + $0x78] sm:$0xf]
    %v208 = vld [vmem:[#allocation7 + $0x7c] sm:$0xf]
    %v209 = vld [vmem:[%s4] sm:$0x1]
    %v210 = vpack.c.bf16 %v175, %v173
    %v211 = vpack.c.bf16 %v176, %v174
    %v213 = vlaneseq
    %v214 = vshrl.u32 %v213, 7
    %v215 = vsub.s32 0, %v214
    %v216 = vrot.slane %v209, %v215
    %v250 = vunpack.c.l.b16 %v177
    %v251 = vunpack.c.l.b16 %v178
    %v252 = vunpack.c.l.b16 %v179
    %v253 = vunpack.c.l.b16 %v180
    %v254 = vunpack.c.l.b16 %v181
    %v255 = vunpack.c.l.b16 %v182
    %v256 = vunpack.c.l.b16 %v183
    %v257 = vunpack.c.l.b16 %v184
    %v258 = vunpack.c.l.b16 %v185
    %v259 = vunpack.c.l.b16 %v186
    %v260 = vunpack.c.l.b16 %v187
    %v261 = vunpack.c.l.b16 %v188
    %v262 = vunpack.c.l.b16 %v189
    %v263 = vunpack.c.l.b16 %v190
    %v264 = vunpack.c.l.b16 %v191
    %v265 = vunpack.c.l.b16 %v192
    %v266 = vunpack.c.l.b16 %v193
    %v267 = vunpack.c.l.b16 %v194
    %v268 = vunpack.c.l.b16 %v195
    %v269 = vunpack.c.l.b16 %v196
    %v270 = vunpack.c.l.b16 %v197
    %v271 = vunpack.c.l.b16 %v198
    %v272 = vunpack.c.l.b16 %v199
    %v273 = vunpack.c.l.b16 %v200
    %v274 = vunpack.c.l.b16 %v201
    %v275 = vunpack.c.l.b16 %v202
    %v276 = vunpack.c.l.b16 %v203
    %v277 = vunpack.c.l.b16 %v204
    %v278 = vunpack.c.l.b16 %v205
    %v279 = vunpack.c.l.b16 %v206
    %v280 = vunpack.c.l.b16 %v207
    %v281 = vunpack.c.l.b16 %v208
    %v282 = vpack.c.b16 %v251, %v250
    %v283 = vpack.c.b16 %v253, %v252
    %v284 = vpack.c.b16 %v255, %v254
    %v285 = vpack.c.b16 %v257, %v256
    %v286 = vpack.c.b16 %v259, %v258
    %v287 = vpack.c.b16 %v261, %v260
    %v288 = vpack.c.b16 %v263, %v262
    %v289 = vpack.c.b16 %v265, %v264
    %v290 = vpack.c.b16 %v267, %v266
    %v291 = vpack.c.b16 %v269, %v268
    %v292 = vpack.c.b16 %v271, %v270
    %v293 = vpack.c.b16 %v273, %v272
    %v294 = vpack.c.b16 %v275, %v274
    %v295 = vpack.c.b16 %v277, %v276
    %v296 = vpack.c.b16 %v279, %v278
    %v297 = vpack.c.b16 %v281, %v280
    %314 = vmatprep.subr.bf16.mxu0 0
    %315 = vmatpush1.bf16.msra.mxu0 %v282
    %316 = vmatprep.subr.bf16.mxu0 0
    %317 = vmatpush1.bf16.msra.mxu0 %v283
    %318 = vmatprep.subr.bf16.mxu0 0
    %319 = vmatpush1.bf16.msra.mxu0 %v284
    %320 = vmatprep.subr.bf16.mxu0 0
    %321 = vmatpush1.bf16.msra.mxu0 %v285
    %322 = vmatprep.subr.bf16.mxu0 0
    %323 = vmatpush1.bf16.msra.mxu0 %v286
    %324 = vmatprep.subr.bf16.mxu0 0
    %325 = vmatpush1.bf16.msra.mxu0 %v287
    %326 = vmatprep.subr.bf16.mxu0 0
    %327 = vmatpush1.bf16.msra.mxu0 %v288
    %328 = vmatprep.subr.bf16.mxu0 0
    %329 = vmatpush1.bf16.msra.mxu0 %v289
    %330 = vmatprep.subr.bf16.mxu0 0
    %331 = vmatpush1.bf16.msra.mxu0 %v290
    %332 = vmatprep.subr.bf16.mxu0 0
    %333 = vmatpush1.bf16.msra.mxu0 %v291
    %334 = vmatprep.subr.bf16.mxu0 0
    %335 = vmatpush1.bf16.msra.mxu0 %v292
    %336 = vmatprep.subr.bf16.mxu0 0
    %337 = vmatpush1.bf16.msra.mxu0 %v293
    %338 = vmatprep.subr.bf16.mxu0 0
    %339 = vmatpush1.bf16.msra.mxu0 %v294
    %340 = vmatprep.subr.bf16.mxu0 0
    %341 = vmatpush1.bf16.msra.mxu0 %v295
    %342 = vmatprep.subr.bf16.mxu0 0
    %343 = vmatpush1.bf16.msra.mxu0 %v296
    %344 = vmatprep.subr.bf16.mxu0 0
    %345 = vmatpush1.bf16.msra.mxu0 %v297
    %346 = vmatprep.mubr.bf16.mxu0 %v211
    %347 = vmatmul.mubr.bf16.gmra.mrb[0].mxu0 %v210
    %v348 = vpop.f32.mrb[0].mxu0
    %v349 = vadd.f32 %v216, %v348
    %v350 = vpop.f32.mrb[0].mxu0
    %v351 = vpop.f32.mrb[0].mxu0
    %v352 = vadd.f32 %v216, %v351
    %v353 = vpop.f32.mrb[0].mxu0
    %354 = vdwg.mxu0
    %v355 = vmax.f32 %v349, 0.0
    %v356 = vmax.f32 %v352, 0.0
    %357 = vst [vmem:[#allocation8] sm:$0xff] %v355
    %358 = vst [vmem:[#allocation8 + $0x8] sm:$0xff] %v356
    // Predicated region
    $region34: #{tpu_custom_call.1} parent=1 // pred_check
      _
    $region35: #{tpu_custom_call.1} parent=1 // pred_check_branch
      %360 = sbr.rel (0) target = $region37
    $region36: #{tpu_custom_call.1} parent=1 // pred_region
      %s362 = ssub.s32 256, 256
      %363 = vsyncadd [#allocation4], %s362
      %s364 = sshll.u32 [#allocation8], 4
      %s365 = int_to_ptr.vmem [resolvable:$true] %s364
      %370 = dma.vmem_to_hbm [thread:$0]  %s365, 256, %s5, [#allocation4], 128, 128, 8
    $region37: #{tpu_custom_call.1} parent=1 // pred_fallthru
      _
    // Predicated region
    $region38: #{tpu_custom_call.1} parent=1 // pred_check
      _
    $region39: #{tpu_custom_call.1} parent=1 // pred_check_branch
      %372 = sbr.rel (0) target = $region41
    $region40: #{tpu_custom_call.1} parent=1 // pred_region
      %373 = dma.done [#allocation4], 256
    $region41: #{tpu_custom_call.1} parent=1 // pred_fallthru
      _
    %374 = vsyncpa [#allocation3], 1
    %375 = vsyncpa [#allocation6], 1
    %376 = vsyncpa [#allocation4], 1

</llo_original>
